<compile_context>
chip_gen: v6e
topology: v6e:2x2x1
jax: 0.10.0
libtpu: 0.0.40
codegen_flags: <defaults>
</compile_context>

<pallas_src>
import jax
import jax.numpy as jnp
from jax.experimental import pallas as pl
from jax.experimental.pallas import tpu as pltpu


_LANE = 128
_SUBLANE = 8


def _ceil_to(v, m):
    return -(-v // m) * m


def _padded_bytes(shape, itemsize=4):
    """VMEM footprint of one f32 block with the last two dims padded to (8,128)."""
    shape = tuple(shape)
    if len(shape) == 1:
        shape = (1,) + shape
    lead = 1
    for d in shape[:-2]:
        lead *= int(d)
    s = _ceil_to(int(shape[-2]), _SUBLANE)
    l = _ceil_to(int(shape[-1]), _LANE)
    return lead * s * l * itemsize


def _vmem_capacity_bytes():
    """Physical per-core VMEM (generation aware); conservative fallback."""
    try:
        info = pltpu.get_tpu_info()
        cap = getattr(info, "vmem_capacity_bytes", None)
        if cap:
            return int(cap)
    except Exception:
        pass
    return 128 * 1024 * 1024  # v5e/v6e; v7x reports its 64 MiB via get_tpu_info


def _vmem_limit(required_bytes, cap):
    """Actual requirement + margin (documents the footprint), below physical."""
    return int(min(cap * 9 // 10,
                   max(32 * 1024 * 1024, 2 * int(required_bytes) + (4 << 20))))


def _phase1_req_bytes(bt, c, tn):
    return (2 * _padded_bytes((bt, c, tn))      # x tiles, double-buffered
            + 2 * _padded_bytes((c, c))         # weights (default double buffer)
            + _padded_bytes((bt, c, c))         # Gram accumulator scratch
            + _padded_bytes((bt, c, 1))         # per-channel sum scratch
            + 2 * _padded_bytes((bt, c, 8)))    # packed stats output


def _phase2_req_bytes(tm, tn):
    return (4 * _padded_bytes((tm, tn))         # x in + out, double-buffered
            + 4 * _padded_bytes((tm, 1)))       # mult/add coefficient columns


def _choose_phase1_tiles(B, C, N, cap):
    """(Bt, tn, padded_N): biggest lane-dense N tile that divides padded N and
    fits half of VMEM; Bt batches per step to reach ~2 MiB of x per grid step."""
    budget = cap // 2
    npad = max(_LANE, _ceil_to(N, _LANE))
    tn = _LANE
    for cand in (2048, 1024, 512, 256, 128):
        if cand <= npad and npad % cand == 0 and _phase1_req_bytes(1, C, cand) <= budget:
            tn = cand
            break
    divisors = [d for d in range(1, B + 1) if B % d == 0]
    fitting = [d for d in divisors if _phase1_req_bytes(d, C, tn) <= budget]
    if not fitting:
        bt = 1
    else:
        target = 2 << 20
        cpad = _ceil_to(C, _SUBLANE)
        bt = fitting[-1]                         # largest that fits if none hit target
        for d in fitting:
            if d * cpad * tn * 4 >= target:      # smallest reaching ~2 MiB/step
                bt = d
                break
    return bt, tn, npad


def _choose_phase2_tiles(R, Np, cap):
    budget = cap // 2
    tm = R
    for cand in (512, 256, 128, 64, 32, 16, 8):
        if R % cand == 0:
            tm = cand
            break
    tn = _LANE
    for cand in (4096, 2048, 1024, 512, 256, 128):
        if cand <= Np and Np % cand == 0 and _phase2_req_bytes(tm, cand) <= budget:
            tn = cand
            break
    return tm, tn


# ---------------------------------------------------------------------------
# Phase 1: per-batch Gram matrix + reduction statistics (streamed over N).
# ---------------------------------------------------------------------------
def _stats_kernel(x_ref, w_ref, stats_ref, gram_acc, xs_acc):
    j = pl.program_id(1)

    @pl.when(j == 0)
    def _init():
        gram_acc[...] = jnp.zeros_like(gram_acc)
        xs_acc[...] = jnp.zeros_like(xs_acc)

    x = x_ref[...]                                  # (Bt, C, tn) f32
    xb = x.astype(jnp.bfloat16)
    # Gram accumulation at full bf16 MXU rate, f32 accumulation.
    gram_acc[...] += jnp.einsum('bcn,bdn->bcd', xb, xb,
                                preferred_element_type=jnp.float32)
    # Only extra per-tile vector work: one f32 lane reduction for sum(x).
    # sum(x^2) per channel is exactly diag(gram) -> recovered at finalize.
    xs_acc[...] += jnp.sum(x, axis=-1, keepdims=True)

    @pl.when(j == pl.num_programs(1) - 1)
    def _finalize():
        gram = gram_acc[...]                        # (Bt, C, C) f32
        w = w_ref[...]                              # (C, C)
        bt, c, _ = gram.shape
        rows = jax.lax.broadcasted_iota(jnp.int32, (bt, c, c), 1)
        cols = jax.lax.broadcasted_iota(jnp.int32, (bt, c, c), 2)
        diag = jnp.where(rows == cols, gram, 0.0)

        # `scale` is folded out; applied once to the (B, C) result in the wrapper.
        attn = jnp.sum(gram * w[None], axis=-1, keepdims=True)     # (Bt, C, 1)
        xsumsq = jnp.sum(diag, axis=-1, keepdims=True)             # sum_n x^2
        gsum = jnp.sum(gram, axis=-1, keepdims=True)
        gsumsq = jnp.sum(gram * gram, axis=-1, keepdims=True)

        # Pack the five statistics into lanes 0..4 of a single output block.
        lane = jax.lax.broadcasted_iota(jnp.int32, (bt, c, 8), 2)
        packed = jnp.where(lane == 0, attn, 0.0)
        packed = packed + jnp.where(lane == 1, xs_acc[...], 0.0)
        packed = packed + jnp.where(lane == 2, xsumsq, 0.0)
        packed = packed + jnp.where(lane == 3, gsum, 0.0)
        packed = packed + jnp.where(lane == 4, gsumsq, 0.0)
        stats_ref[...] = packed


# ---------------------------------------------------------------------------
# Phase 2: single fused FMA pass over (B*C, N) rows.
#   out = x * s_row + add_row  (residual add + BN normalize + BN affine folded)
# ---------------------------------------------------------------------------
def _apply_kernel(x_ref, m_ref, a_ref, o_ref):
    o_ref[...] = x_ref[...] * m_ref[...] + a_ref[...]


def planar_attention(x_nchw, weights, gamma, beta, *, eps=1e-5):
    """x_nchw: (B, C, H, W) float32. Returns (B, C, H, W) float32."""
    B, C, H, W = x_nchw.shape
    N = H * W
    cap = _vmem_capacity_bytes()

    x = x_nchw.reshape(B, C, N).astype(jnp.float32)
    w = weights.astype(jnp.float32)
    gamma = gamma.reshape(C).astype(jnp.float32)
    beta = beta.reshape(C).astype(jnp.float32)

    bt, tn, npad = _choose_phase1_tiles(B, C, N, cap)
    if npad != N:
        # Zero padding is exact for gram / sum / sum-of-squares statistics.
        x = jnp.pad(x, ((0, 0), (0, 0), (0, npad - N)))
    nt = npad // tn

    req1 = _phase1_req_bytes(bt, C, tn)
    stats = pl.pallas_call(
        _stats_kernel,
        out_shape=jax.ShapeDtypeStruct((B, C, 8), jnp.float32),
        grid=(B // bt, nt),
        in_specs=[
            pl.BlockSpec((bt, C, tn), lambda b, j: (b, 0, j)),   # x tile (lane-dense)
            pl.BlockSpec((C, C), lambda b, j: (0, 0)),           # weights (resident)
        ],
        out_specs=pl.BlockSpec((bt, C, 8), lambda b, j: (b, 0, 0)),
        scratch_shapes=[
            pltpu.VMEM((bt, C, C), jnp.float32),   # Gram accumulator
            pltpu.VMEM((bt, C, 1), jnp.float32),   # per-channel sum(x)
        ],
        compiler_params=pltpu.CompilerParams(
            dimension_semantics=("parallel", "arbitrary"),
            vmem_limit_bytes=_vmem_limit(req1, cap),
        ),
        cost_estimate=pl.CostEstimate(
            flops=2 * B * C * C * npad + 2 * B * C * npad,
            transcendentals=0,
            bytes_accessed=4 * (B * C * npad + C * C + 8 * B * C),
        ),
    )(x, w)

    attn_raw = stats[:, :, 0]     # (B, C) : sum_d gram[b,c,d] * W[c,d]
    xsum_bc = stats[:, :, 1]      # (B, C) : sum_n x[b,c,n]
    xsumsq_bc = stats[:, :, 2]    # (B, C) : sum_n x[b,c,n]^2  (= diag of gram)
    gsum_bc = stats[:, :, 3]      # (B, C) : sum_d gram[b,c,d]
    gsumsq_bc = stats[:, :, 4]    # (B, C) : sum_d gram[b,c,d]^2

    # ---- tiny O(B*C) glue (plain XLA) -------------------------------------
    # Unbiased global variances (torch.var default), one-pass form.
    n_x = B * C * N
    mu_x = jnp.sum(xsum_bc) / n_x
    var_x = (jnp.sum(xsumsq_bc) - n_x * mu_x * mu_x) / (n_x - 1)

    n_g = B * C * C
    mu_g = jnp.sum(gsum_bc) / n_g
    var_g = (jnp.sum(gsumsq_bc) - n_g * mu_g * mu_g) / (n_g - 1)

    scale = var_g / var_x
    a = attn_raw / scale                        # (B, C) attention bias

    # BatchNorm2d (training mode, fresh module): channel stats of y = x + a,
    # derived algebraically from the already-computed sums (no extra data pass).
    cnt = B * N
    mean_c = (jnp.sum(xsum_bc, axis=0) + N * jnp.sum(a, axis=0)) / cnt
    ey2_c = (jnp.sum(xsumsq_bc, axis=0)
             + 2.0 * jnp.sum(a * xsum_bc, axis=0)
             + N * jnp.sum(a * a, axis=0)) / cnt
    var_c = jnp.maximum(ey2_c - mean_c * mean_c, 0.0)   # clamp one-pass cancellation

    s_c = gamma * jax.lax.rsqrt(var_c + eps)            # (C,)
    b_c = beta - mean_c * s_c                           # (C,)

    # ---- phase 2: row-wise FMA over (B*C, Npad) ----------------------------
    R = B * C
    x_rows = x.reshape(R, npad)
    mult_rows = jnp.broadcast_to(s_c[None, :], (B, C)).reshape(R, 1)
    add_rows = (a * s_c[None, :] + b_c[None, :]).reshape(R, 1)

    tm, tn2 = _choose_phase2_tiles(R, npad, cap)
    req2 = _phase2_req_bytes(tm, tn2)
    # NOTE: input/output aliasing (donating x) is deliberately not used here:
    # the caller's x is not donated, so XLA would insert a full-size copy.
    out_rows = pl.pallas_call(
        _apply_kernel,
        out_shape=jax.ShapeDtypeStruct((R, npad), jnp.float32),
        grid=(R // tm, npad // tn2),
        in_specs=[
            pl.BlockSpec((tm, tn2), lambda i, j: (i, j)),
            pl.BlockSpec((tm, 1), lambda i, j: (i, 0)),
            pl.BlockSpec((tm, 1), lambda i, j: (i, 0)),
        ],
        out_specs=pl.BlockSpec((tm, tn2), lambda i, j: (i, j)),
        compiler_params=pltpu.CompilerParams(
            dimension_semantics=("parallel", "parallel"),
            vmem_limit_bytes=_vmem_limit(req2, cap),
        ),
        cost_estimate=pl.CostEstimate(
            flops=2 * R * npad,
            transcendentals=0,
            bytes_accessed=4 * (2 * R * npad + 2 * R),
        ),
    )(x_rows, mult_rows, add_rows)

    out = out_rows.reshape(B, C, npad)
    if npad != N:
        out = out[:, :, :N]
    # TODO(synk): BatchNorm running_mean/running_var buffer updates (a training
    # side effect) are not materialized; they do not affect this forward output.
    return out.reshape(B, C, H, W)


# ---------------------------------------------------------------------------
# Pure-JAX reference of the PyTorch forward (for a sanity check).
# ---------------------------------------------------------------------------
def _planar_attention_ref(x, weights, gamma, beta, eps=1e-5):
    B, C, H, W = x.shape
    xf = x.reshape(B, C, H * W)
    gram = jnp.einsum('bcn,bdn->bcd', xf, xf,
                      preferred_element_type=jnp.float32,
                      precision=jax.lax.Precision.HIGHEST)
    scale = jnp.var(gram, ddof=1) / jnp.var(x, ddof=1)
    a = jnp.sum((gram / scale) * weights[None], axis=-1)
    y = x + a[:, :, None, None]
    mean_c = jnp.mean(y, axis=(0, 2, 3), keepdims=True)
    var_c = jnp.var(y, axis=(0, 2, 3), keepdims=True)          # biased (BN training)
    y_hat = (y - mean_c) * jax.lax.rsqrt(var_c + eps)
    return y_hat * gamma.reshape(1, C, 1, 1) + beta.reshape(1, C, 1, 1)


if __name__ == "__main__":
    B, C, H, W = 2, 4, 16, 16  # planes = C

    key = jax.random.PRNGKey(0)
    k_x, k_w = jax.random.split(key)

    x = jax.random.normal(k_x, (B, C, H, W), dtype=jnp.float32)
    # nn.init.kaiming_normal_ on (planes, planes): std = sqrt(2 / fan_in) = sqrt(2/C).
    weights = jax.random.normal(k_w, (C, C), dtype=jnp.float32) * jnp.sqrt(2.0 / C)
    # BatchNorm2d affine params at init: gamma = 1, beta = 0.
    gamma = jnp.ones((C,), dtype=jnp.float32)
    beta = jnp.zeros((C,), dtype=jnp.float32)

    fn = jax.jit(planar_attention)
    out = fn(x, weights, gamma, beta)
    jax.block_until_ready(out)
    assert out.shape == (B, C, H, W)
    assert bool(jnp.all(jnp.isfinite(out)))

    ref = _planar_attention_ref(x, weights, gamma, beta)
    assert bool(jnp.allclose(out, ref, rtol=2e-2, atol=2e-2)), \
        float(jnp.max(jnp.abs(out - ref)))

    print("KERNEL_OK")
</pallas_src>

<mosaic_0001>
module attributes {stable_mosaic.version = 11 : i64} {
  func.func @_stats_kernel(%arg0: i32, %arg1: i32, %arg2: memref<2x4x256xf32, #tpu.memory_space<vmem>>, %arg3: memref<4x4xf32, #tpu.memory_space<vmem>>, %arg4: memref<2x4x8xf32, #tpu.memory_space<vmem>>, %arg5: memref<2x4x4xf32, #tpu.memory_space<vmem>>, %arg6: memref<2x4x1xf32, #tpu.memory_space<vmem>>) attributes {dimension_semantics = [#tpu.dimension_semantics<parallel>, #tpu.dimension_semantics<arbitrary>], iteration_bounds = array<i64: 1, 1>, scalar_prefetch = 0 : i64, scratch_operands = 2 : i64, tpu.core_type = #tpu.core_type<tc>, window_params = [{transform_indices = @transform_0, window_bounds = array<i64: 2, 4, 256>}, {pipeline_mode = #tpu.pipeline_mode<synchronous>, transform_indices = @transform_1, window_bounds = array<i64: 4, 4>}, {transform_indices = @transform_2, window_bounds = array<i64: 2, 4, 8>}]} {
    %c0_i32 = arith.constant 0 : i32
    %0 = arith.cmpi eq, %arg1, %c0_i32 : i32
    %1 = arith.extui %0 : i1 to i32
    %c0_i32_0 = arith.constant 0 : i32
    %2 = arith.cmpi ne, %1, %c0_i32_0 : i32
    scf.if %2 {
      %cst_18 = arith.constant 0.000000e+00 : f32
      %17 = vector.broadcast %cst_18 : f32 to vector<2x4x4xf32>
      %c0_19 = arith.constant 0 : index
      %c0_20 = arith.constant 0 : index
      %c0_21 = arith.constant 0 : index
      %18 = vector.load %arg5[%c0_19, %c0_20, %c0_21] : memref<2x4x4xf32, #tpu.memory_space<vmem>>, vector<2x4x4xf32>
      tpu.vector_store %arg5[%c0_19, %c0_20, %c0_21], %17 {strides = array<i32>} : memref<2x4x4xf32, #tpu.memory_space<vmem>>, vector<2x4x4xf32>,
      %cst_22 = arith.constant 0.000000e+00 : f32
      %19 = vector.broadcast %cst_22 : f32 to vector<2x4x1xf32>
      %c0_23 = arith.constant 0 : index
      %c0_24 = arith.constant 0 : index
      %c0_25 = arith.constant 0 : index
      %20 = vector.load %arg6[%c0_23, %c0_24, %c0_25] : memref<2x4x1xf32, #tpu.memory_space<vmem>>, vector<2x4x1xf32>
      tpu.vector_store %arg6[%c0_23, %c0_24, %c0_25], %19 {strides = array<i32>} : memref<2x4x1xf32, #tpu.memory_space<vmem>>, vector<2x4x1xf32>,
    } else {
    }
    %c0 = arith.constant 0 : index
    %c0_1 = arith.constant 0 : index
    %c0_2 = arith.constant 0 : index
    %3 = vector.load %arg2[%c0, %c0_1, %c0_2] : memref<2x4x256xf32, #tpu.memory_space<vmem>>, vector<2x4x256xf32>
    %4 = arith.truncf %3 : vector<2x4x256xf32> to vector<2x4x256xbf16>
    %c0_3 = arith.constant 0 : index
    %c0_4 = arith.constant 0 : index
    %c0_5 = arith.constant 0 : index
    %5 = vector.load %arg5[%c0_3, %c0_4, %c0_5] : memref<2x4x4xf32, #tpu.memory_space<vmem>>, vector<2x4x4xf32>
    "tpu.trace_start"() <{level = 10 : i32, message = "bcn,bdn->bcd"}> : () -> ()
    %cst = arith.constant dense<0.000000e+00> : vector<2x4x4xf32>
    %6 = tpu.matmul %4, %4, %cst {dimension_numbers = #tpu.dot_dimension_numbers<[2], [2], [1], [1], [0, 0, 0, 1, 1, 1], [0], [0]>} : vector<2x4x256xbf16>, vector<2x4x256xbf16>, vector<2x4x4xf32> -> vector<2x4x4xf32>
    "tpu.trace_stop"() : () -> ()
    %7 = arith.addf %5, %6 : vector<2x4x4xf32>
    %c0_6 = arith.constant 0 : index
    %c0_7 = arith.constant 0 : index
    %c0_8 = arith.constant 0 : index
    %8 = vector.load %arg5[%c0_6, %c0_7, %c0_8] : memref<2x4x4xf32, #tpu.memory_space<vmem>>, vector<2x4x4xf32>
    tpu.vector_store %arg5[%c0_6, %c0_7, %c0_8], %7 {strides = array<i32>} : memref<2x4x4xf32, #tpu.memory_space<vmem>>, vector<2x4x4xf32>,
    %c0_9 = arith.constant 0 : index
    %c0_10 = arith.constant 0 : index
    %c0_11 = arith.constant 0 : index
    %9 = vector.load %arg6[%c0_9, %c0_10, %c0_11] : memref<2x4x1xf32, #tpu.memory_space<vmem>>, vector<2x4x1xf32>
    %cst_12 = arith.constant dense<0.000000e+00> : vector<2x4xf32>
    %10 = vector.multi_reduction <add>, %3, %cst_12 [2] : vector<2x4x256xf32> to vector<2x4xf32>
    %11 = vector.shape_cast %10 : vector<2x4xf32> to vector<2x4x1xf32>
    %12 = arith.addf %9, %11 : vector<2x4x1xf32>
    %c0_13 = arith.constant 0 : index
    %c0_14 = arith.constant 0 : index
    %c0_15 = arith.constant 0 : index
    %13 = vector.load %arg6[%c0_13, %c0_14, %c0_15] : memref<2x4x1xf32, #tpu.memory_space<vmem>>, vector<2x4x1xf32>
    tpu.vector_store %arg6[%c0_13, %c0_14, %c0_15], %12 {strides = array<i32>} : memref<2x4x1xf32, #tpu.memory_space<vmem>>, vector<2x4x1xf32>,
    %c0_i32_16 = arith.constant 0 : i32
    %14 = arith.cmpi eq, %arg1, %c0_i32_16 : i32
    %15 = arith.extui %14 : i1 to i32
    %c0_i32_17 = arith.constant 0 : i32
    %16 = arith.cmpi ne, %15, %c0_i32_17 : i32
    scf.if %16 {
      %c0_18 = arith.constant 0 : index
      %c0_19 = arith.constant 0 : index
      %c0_20 = arith.constant 0 : index
      %17 = vector.load %arg5[%c0_18, %c0_19, %c0_20] : memref<2x4x4xf32, #tpu.memory_space<vmem>>, vector<2x4x4xf32>
      %c0_21 = arith.constant 0 : index
      %c0_22 = arith.constant 0 : index
      %18 = vector.load %arg3[%c0_21, %c0_22] : memref<4x4xf32, #tpu.memory_space<vmem>>, vector<4x4xf32>
      %19 = tpu.iota {dimensions = array<i32: 1>} : vector<2x4x4xi32>
      %20 = tpu.iota {dimensions = array<i32: 2>} : vector<2x4x4xi32>
      %21 = arith.cmpi eq, %19, %20 : vector<2x4x4xi32>
      %cst_23 = arith.constant 0.000000e+00 : f32
      %22 = vector.broadcast %cst_23 : f32 to vector<2x4x4xf32>
      %23 = arith.select %21, %17, %22 : vector<2x4x4xi1>, vector<2x4x4xf32>
      %24 = vector.shape_cast %18 : vector<4x4xf32> to vector<1x4x4xf32>
      %25 = vector.broadcast %24 : vector<1x4x4xf32> to vector<2x4x4xf32>
      %26 = arith.mulf %17, %25 : vector<2x4x4xf32>
      %cst_24 = arith.constant dense<0.000000e+00> : vector<2x4xf32>
      %27 = vector.multi_reduction <add>, %26, %cst_24 [2] : vector<2x4x4xf32> to vector<2x4xf32>
      %28 = vector.shape_cast %27 : vector<2x4xf32> to vector<2x4x1xf32>
      %cst_25 = arith.constant dense<0.000000e+00> : vector<2x4xf32>
      %29 = vector.multi_reduction <add>, %23, %cst_25 [2] : vector<2x4x4xf32> to vector<2x4xf32>
      %30 = vector.shape_cast %29 : vector<2x4xf32> to vector<2x4x1xf32>
      %cst_26 = arith.constant dense<0.000000e+00> : vector<2x4xf32>
      %31 = vector.multi_reduction <add>, %17, %cst_26 [2] : vector<2x4x4xf32> to vector<2x4xf32>
      %32 = vector.shape_cast %31 : vector<2x4xf32> to vector<2x4x1xf32>
      %33 = arith.mulf %17, %17 : vector<2x4x4xf32>
      %cst_27 = arith.constant dense<0.000000e+00> : vector<2x4xf32>
      %34 = vector.multi_reduction <add>, %33, %cst_27 [2] : vector<2x4x4xf32> to vector<2x4xf32>
      %35 = vector.shape_cast %34 : vector<2x4xf32> to vector<2x4x1xf32>
      %36 = tpu.iota {dimensions = array<i32: 2>} : vector<2x4x8xi32>
      %c0_i32_28 = arith.constant 0 : i32
      %37 = vector.broadcast %c0_i32_28 : i32 to vector<2x4x8xi32>
      %38 = arith.cmpi eq, %36, %37 : vector<2x4x8xi32>
      %cst_29 = arith.constant 0.000000e+00 : f32
      %39 = vector.shape_cast %28 : vector<2x4x1xf32> to vector<2x4x1xf32>
      %40 = vector.broadcast %39 : vector<2x4x1xf32> to vector<2x4x8xf32>
      %41 = vector.broadcast %cst_29 : f32 to vector<2x4x8xf32>
      %42 = arith.select %38, %40, %41 : vector<2x4x8xi1>, vector<2x4x8xf32>
      %c1_i32 = arith.constant 1 : i32
      %43 = vector.broadcast %c1_i32 : i32 to vector<2x4x8xi32>
      %44 = arith.cmpi eq, %36, %43 : vector<2x4x8xi32>
      %c0_30 = arith.constant 0 : index
      %c0_31 = arith.constant 0 : index
      %c0_32 = arith.constant 0 : index
      %45 = vector.load %arg6[%c0_30, %c0_31, %c0_32] : memref<2x4x1xf32, #tpu.memory_space<vmem>>, vector<2x4x1xf32>
      %cst_33 = arith.constant 0.000000e+00 : f32
      %46 = vector.shape_cast %45 : vector<2x4x1xf32> to vector<2x4x1xf32>
      %47 = vector.broadcast %46 : vector<2x4x1xf32> to vector<2x4x8xf32>
      %48 = vector.broadcast %cst_33 : f32 to vector<2x4x8xf32>
      %49 = arith.select %44, %47, %48 : vector<2x4x8xi1>, vector<2x4x8xf32>
      %50 = arith.addf %42, %49 : vector<2x4x8xf32>
      %c2_i32 = arith.constant 2 : i32
      %51 = vector.broadcast %c2_i32 : i32 to vector<2x4x8xi32>
      %52 = arith.cmpi eq, %36, %51 : vector<2x4x8xi32>
      %cst_34 = arith.constant 0.000000e+00 : f32
      %53 = vector.shape_cast %30 : vector<2x4x1xf32> to vector<2x4x1xf32>
      %54 = vector.broadcast %53 : vector<2x4x1xf32> to vector<2x4x8xf32>
      %55 = vector.broadcast %cst_34 : f32 to vector<2x4x8xf32>
      %56 = arith.select %52, %54, %55 : vector<2x4x8xi1>, vector<2x4x8xf32>
      %57 = arith.addf %50, %56 : vector<2x4x8xf32>
      %c3_i32 = arith.constant 3 : i32
      %58 = vector.broadcast %c3_i32 : i32 to vector<2x4x8xi32>
      %59 = arith.cmpi eq, %36, %58 : vector<2x4x8xi32>
      %cst_35 = arith.constant 0.000000e+00 : f32
      %60 = vector.shape_cast %32 : vector<2x4x1xf32> to vector<2x4x1xf32>
      %61 = vector.broadcast %60 : vector<2x4x1xf32> to vector<2x4x8xf32>
      %62 = vector.broadcast %cst_35 : f32 to vector<2x4x8xf32>
      %63 = arith.select %59, %61, %62 : vector<2x4x8xi1>, vector<2x4x8xf32>
      %64 = arith.addf %57, %63 : vector<2x4x8xf32>
      %c4_i32 = arith.constant 4 : i32
      %65 = vector.broadcast %c4_i32 : i32 to vector<2x4x8xi32>
      %66 = arith.cmpi eq, %36, %65 : vector<2x4x8xi32>
      %cst_36 = arith.constant 0.000000e+00 : f32
      %67 = vector.shape_cast %35 : vector<2x4x1xf32> to vector<2x4x1xf32>
      %68 = vector.broadcast %67 : vector<2x4x1xf32> to vector<2x4x8xf32>
      %69 = vector.broadcast %cst_36 : f32 to vector<2x4x8xf32>
      %70 = arith.select %66, %68, %69 : vector<2x4x8xi1>, vector<2x4x8xf32>
      %71 = arith.addf %64, %70 : vector<2x4x8xf32>
      %c0_37 = arith.constant 0 : index
      %c0_38 = arith.constant 0 : index
      %c0_39 = arith.constant 0 : index
      %72 = vector.load %arg4[%c0_37, %c0_38, %c0_39] : memref<2x4x8xf32, #tpu.memory_space<vmem>>, vector<2x4x8xf32>
      tpu.vector_store %arg4[%c0_37, %c0_38, %c0_39], %71 {strides = array<i32>} : memref<2x4x8xf32, #tpu.memory_space<vmem>>, vector<2x4x8xf32>,
    } else {
    }
    return
  }
  func.func @transform_0(%arg0: i32, %arg1: i32) -> (i32, i32, i32) {
    %c0_i32 = arith.constant 0 : i32
    %c0_i32_0 = arith.constant 0 : i32
    return %arg0, %c0_i32, %arg1 : i32, i32, i32
  }
  func.func @transform_1(%arg0: i32, %arg1: i32) -> (i32, i32) {
    %c0_i32 = arith.constant 0 : i32
    %c0_i32_0 = arith.constant 0 : i32
    %c0_i32_1 = arith.constant 0 : i32
    return %c0_i32, %c0_i32_0 : i32, i32
  }
  func.func @transform_2(%arg0: i32, %arg1: i32) -> (i32, i32, i32) {
    %c0_i32 = arith.constant 0 : i32
    %c0_i32_0 = arith.constant 0 : i32
    %c0_i32_1 = arith.constant 0 : i32
    return %arg0, %c0_i32, %c0_i32_0 : i32, i32, i32
  }
}

module attributes {stable_mosaic.version = 11 : i64} {
  func.func @_apply_kernel(%arg0: i32, %arg1: i32, %arg2: memref<8x256xf32, #tpu.memory_space<vmem>>, %arg3: memref<8x1xf32, #tpu.memory_space<vmem>>, %arg4: memref<8x1xf32, #tpu.memory_space<vmem>>, %arg5: memref<8x256xf32, #tpu.memory_space<vmem>>) attributes {dimension_semantics = [#tpu.dimension_semantics<parallel>, #tpu.dimension_semantics<parallel>], iteration_bounds = array<i64: 1, 1>, scalar_prefetch = 0 : i64, scratch_operands = 0 : i64, tpu.core_type = #tpu.core_type<tc>, window_params = [{transform_indices = @transform_0, window_bounds = array<i64: 8, 256>}, {transform_indices = @transform_1, window_bounds = array<i64: 8, 1>}, {transform_indices = @transform_2, window_bounds = array<i64: 8, 1>}, {transform_indices = @transform_3, window_bounds = array<i64: 8, 256>}]} {
    %c0 = arith.constant 0 : index
    %c0_0 = arith.constant 0 : index
    %0 = vector.load %arg2[%c0, %c0_0] : memref<8x256xf32, #tpu.memory_space<vmem>>, vector<8x256xf32>
    %c0_1 = arith.constant 0 : index
    %c0_2 = arith.constant 0 : index
    %1 = vector.load %arg3[%c0_1, %c0_2] : memref<8x1xf32, #tpu.memory_space<vmem>>, vector<8x1xf32>
    %2 = vector.broadcast %1 : vector<8x1xf32> to vector<8x256xf32>
    %3 = arith.mulf %0, %2 : vector<8x256xf32>
    %c0_3 = arith.constant 0 : index
    %c0_4 = arith.constant 0 : index
    %4 = vector.load %arg4[%c0_3, %c0_4] : memref<8x1xf32, #tpu.memory_space<vmem>>, vector<8x1xf32>
    %5 = vector.broadcast %4 : vector<8x1xf32> to vector<8x256xf32>
    %6 = arith.addf %3, %5 : vector<8x256xf32>
    %c0_5 = arith.constant 0 : index
    %c0_6 = arith.constant 0 : index
    %7 = vector.load %arg5[%c0_5, %c0_6] : memref<8x256xf32, #tpu.memory_space<vmem>>, vector<8x256xf32>
    tpu.vector_store %arg5[%c0_5, %c0_6], %6 {strides = array<i32>} : memref<8x256xf32, #tpu.memory_space<vmem>>, vector<8x256xf32>,
    return
  }
  func.func @transform_0(%arg0: i32, %arg1: i32) -> (i32, i32) {
    %c0_i32 = arith.constant 0 : i32
    return %arg0, %arg1 : i32, i32
  }
  func.func @transform_1(%arg0: i32, %arg1: i32) -> (i32, i32) {
    %c0_i32 = arith.constant 0 : i32
    %c0_i32_0 = arith.constant 0 : i32
    return %arg0, %c0_i32 : i32, i32
  }
  func.func @transform_2(%arg0: i32, %arg1: i32) -> (i32, i32) {
    %c0_i32 = arith.constant 0 : i32
    %c0_i32_0 = arith.constant 0 : i32
    return %arg0, %c0_i32 : i32, i32
  }
  func.func @transform_3(%arg0: i32, %arg1: i32) -> (i32, i32) {
    %c0_i32 = arith.constant 0 : i32
    return %arg0, %arg1 : i32, i32
  }
}

</mosaic_0001>

<llo_original>
// kernel: planar_attention.3
$region0: #{planar_attention.3}
  #allocation0 [shape = 'u32[]', space=smem, size = 0x4, offset = 0x4, fixed_abs, tag = 'smem constant byte address 0x4 - core index']
  #allocation1 [shape = 'u32[144,128]{1,0:T(1,128)}', space=vmem, size = 0x12000, scoped, tag = 'internal scratch']
  %s0 = inlined_call_operand.vmem [shape: f32[8,256], index: 0, kind: input, shape index: {}]
  %s1 = inlined_call_operand.vmem [shape: f32[8,1], index: 1, kind: input, shape index: {}]
  %s2 = inlined_call_operand.vmem [shape: f32[8,1], index: 2, kind: input, shape index: {}]
  %s3 = inlined_call_operand.vmem [shape: f32[8,256], index: 3, kind: output, shape index: {}]
  %s4 = sld [smem:[#allocation0]]
  $region22: #{planar_attention.3} parent=0
    _
  %s6 = ssub.s32 1, %s4
  %s7 = scalar_select 0, %s6, %s4
  // Predicated region
  $region2: #{planar_attention.3} parent=0 // pred_check
    _
  $region3: #{planar_attention.3} parent=0 // pred_check_branch
    %9 = sbr.rel (0) target = $region5
  $region4: #{planar_attention.3} parent=0 // pred_region
    _
  $region5: #{planar_attention.3} parent=0 // pred_fallthru
    _
  // Predicated region
  $region6: #{planar_attention.3} parent=0 // pred_check
    _
  $region7: #{planar_attention.3} parent=0 // pred_check_branch
    %11 = sbr.rel (0) target = $region9
  $region8: #{planar_attention.3} parent=0 // pred_region
    _
  $region9: #{planar_attention.3} parent=0 // pred_fallthru
    _
  // Predicated region
  $region10: #{planar_attention.3} parent=0 // pred_check
    _
  $region11: #{planar_attention.3} parent=0 // pred_check_branch
    %13 = sbr.rel (0) target = $region13
  $region12: #{planar_attention.3} parent=0 // pred_region
    _
  $region13: #{planar_attention.3} parent=0 // pred_fallthru
    _
  %v14 = vld [vmem:[%s0] sm:$0xff]
  %v15 = vld [vmem:[%s0 + $0x8] sm:$0xff]
  %v16 = vld [vmem:[%s1] sm:$0xff]
  %18 = vset.pattern.permute.xlu0 0
  %19 = vperm.xlu0 %18, %v16
  %v20 = vpop.permute.xlu0 %19
  %v22 = vmul.f32 %v14, %v20
  %v23 = vmul.f32 %v15, %v20
  %v24 = vld [vmem:[%s2] sm:$0xff]
  %26 = vset.pattern.permute.xlu0 0
  %27 = vperm.xlu0 %26, %v24
  %v28 = vpop.permute.xlu0 %27
  %v30 = vadd.f32 %v22, %v28
  %v31 = vadd.f32 %v23, %v28
  %32 = vst [vmem:[%s3] sm:$0xff] %v30
  %33 = vst [vmem:[%s3 + $0x8] sm:$0xff] %v31
  // Predicated region
  $region14: #{planar_attention.3} parent=0 // pred_check
    _
  $region15: #{planar_attention.3} parent=0 // pred_check_branch
    %35 = sbr.rel (0) target = $region17
  $region16: #{planar_attention.3} parent=0 // pred_region
    _
  $region17: #{planar_attention.3} parent=0 // pred_fallthru
    _
  // Predicated region
  $region18: #{planar_attention.3} parent=0 // pred_check
    _
  $region19: #{planar_attention.3} parent=0 // pred_check_branch
    %37 = sbr.rel (0) target = $region21
  $region20: #{planar_attention.3} parent=0 // pred_region
    _
  $region21: #{planar_attention.3} parent=0 // pred_fallthru
    _

// kernel: planar_attention.2
$region0: #{planar_attention.2}
  #allocation0 [shape = 'u32[]', space=smem, size = 0x4, offset = 0x4, fixed_abs, tag = 'smem constant byte address 0x4 - core index']
  #allocation1 [shape = 'u32[144,128]{1,0:T(1,128)}', space=vmem, size = 0x12000, scoped, tag = 'internal scratch']
  #allocation2 [shape = 'f32[2,4,4]{2,1,0:T(4,128)}', space=vmem, size = 0x1000, scoped, tag = 'scratch operand']
  #allocation3 [shape = 'f32[2,4,1]{2,1,0:T(4,128)}', space=vmem, size = 0x1000, scoped, tag = 'scratch operand']
  %s0 = inlined_call_operand.vmem [shape: f32[2,4,256], index: 0, kind: input, shape index: {}]
  %s1 = inlined_call_operand.vmem [shape: f32[4,4], index: 1, kind: input, shape index: {}]
  %s2 = inlined_call_operand.vmem [shape: f32[2,4,8], index: 2, kind: output, shape index: {}]
  %s3 = sld [smem:[#allocation0]]
  $region26: #{planar_attention.2} parent=0
    _
  %s5 = ssub.s32 1, %s3
  %s6 = scalar_select 0, %s5, %s3
  // Predicated region
  $region2: #{planar_attention.2} parent=0 // pred_check
    _
  $region3: #{planar_attention.2} parent=0 // pred_check_branch
    %8 = sbr.rel (0) target = $region5
  $region4: #{planar_attention.2} parent=0 // pred_region
    _
  $region5: #{planar_attention.2} parent=0 // pred_fallthru
    _
  // Predicated region
  $region6: #{planar_attention.2} parent=0 // pred_check
    _
  $region7: #{planar_attention.2} parent=0 // pred_check_branch
    %10 = sbr.rel (0) target = $region9
  $region8: #{planar_attention.2} parent=0 // pred_region
    _
  $region9: #{planar_attention.2} parent=0 // pred_fallthru
    _
  %p12 = scmp.eq.s32.totalorder 0, 0
  // Predicated region
  $region10: #{planar_attention.2} parent=0 // pred_check
    %p13 = pneg %p12
  $region11: #{planar_attention.2} parent=0 // pred_check_branch
    %15 = sbr.rel (%p13) target = $region13
  $region12: #{planar_attention.2} parent=0 // pred_region
    %vm16 = vcmask 27648
    %17 = vst.msk [vmem:[#allocation2] sm:$0xf] %vm16, 0.0
    %18 = vst.msk [vmem:[#allocation2 + $0x4] sm:$0xf] %vm16, 0.0
    %vm19 = vcmask 3072
    %20 = vst.msk [vmem:[#allocation3] sm:$0xf] %vm19, 0.0
    %21 = vst.msk [vmem:[#allocation3 + $0x4] sm:$0xf] %vm19, 0.0
  $region13: #{planar_attention.2} parent=0 // pred_fallthru
    _
  %v22 = vld [vmem:[%s0] sm:$0xff]
  %v23 = vld [vmem:[%s0 + $0x8] sm:$0xff]
  %v26 = vcombine.high %v22, %v22
  %v27 = vcombine.high %v23, %v23
  %v30 = vpack.c.bf16 %v22, %v22
  %v31 = vpack.c.bf16 %v26, %v26
  %v32 = vpack.c.bf16 %v23, %v23
  %v33 = vpack.c.bf16 %v27, %v27
  %v34 = vld [vmem:[#allocation2] sm:$0xf]
  %v35 = vld [vmem:[#allocation2 + $0x4] sm:$0xf]
  %36 = vmatprep.subr.bf16.mxu0 0
  %37 = vmatpush1.bf16.xpose.msra.mxu0 0
  %38 = vmatprep.subr.bf16.mxu0 0
  %39 = vmatpush1.bf16.xpose.msra.mxu0 0
  %40 = vmatprep.subr.bf16.mxu0 0
  %41 = vmatpush1.bf16.xpose.msra.mxu0 0
  %42 = vmatprep.subr.bf16.mxu0 0
  %43 = vmatpush1.bf16.xpose.msra.mxu0 0
  %44 = vmatprep.subr.bf16.mxu0 0
  %45 = vmatpush1.bf16.xpose.msra.mxu0 0
  %46 = vmatprep.subr.bf16.mxu0 0
  %47 = vmatpush1.bf16.xpose.msra.mxu0 0
  %48 = vmatprep.subr.bf16.mxu0 0
  %49 = vmatpush1.bf16.xpose.msra.mxu0 0
  %50 = vmatprep.subr.bf16.mxu0 %v31
  %51 = vmatpush1.bf16.xpose.msra.mxu0 %v30
  %52 = vmatprep.subr.bf16.mxu0 0
  %53 = vmatpush2.bf16.xpose.msra.mxu0 0
  %54 = vmatprep.subr.bf16.mxu0 0
  %55 = vmatpush2.bf16.xpose.msra.mxu0 0
  %56 = vmatprep.subr.bf16.mxu0 0
  %57 = vmatpush2.bf16.xpose.msra.mxu0 0
  %58 = vmatprep.subr.bf16.mxu0 0
  %59 = vmatpush2.bf16.xpose.msra.mxu0 0
  %60 = vmatprep.subr.bf16.mxu0 0
  %61 = vmatpush2.bf16.xpose.msra.mxu0 0
  %62 = vmatprep.subr.bf16.mxu0 0
  %63 = vmatpush2.bf16.xpose.msra.mxu0 0
  %64 = vmatprep.subr.bf16.mxu0 0
  %65 = vmatpush2.bf16.xpose.msra.mxu0 0
  %66 = vmatprep.subr.bf16.mxu0 0
  %67 = vmatpush2.bf16.xpose.msra.mxu0 0
  %68 = vmatprep.mubr.bf16.mxu0 %v31
  %69 = vmatmul.mubr.bf16.gmra.mxu0 %v30
  %v70 = vpop.f32.mrf.mxu0
  %v71 = vadd.f32 0.0, %v70
  %v72 = vpop.f32.mrf.mxu0
  %v73 = vpop.f32.mrf.mxu0
  %v74 = vpop.f32.mrf.mxu0
  %75 = vdwg.mxu0
  %76 = vmatprep.subr.bf16.mxu0 0
  %77 = vmatpush1.bf16.xpose.msra.mxu0 0
  %78 = vmatprep.subr.bf16.mxu0 0
  %79 = vmatpush1.bf16.xpose.msra.mxu0 0
  %80 = vmatprep.subr.bf16.mxu0 0
  %81 = vmatpush1.bf16.xpose.msra.mxu0 0
  %82 = vmatprep.subr.bf16.mxu0 0
  %83 = vmatpush1.bf16.xpose.msra.mxu0 0
  %84 = vmatprep.subr.bf16.mxu0 0
  %85 = vmatpush1.bf16.xpose.msra.mxu0 0
  %86 = vmatprep.subr.bf16.mxu0 0
  %87 = vmatpush1.bf16.xpose.msra.mxu0 0
  %88 = vmatprep.subr.bf16.mxu0 0
  %89 = vmatpush1.bf16.xpose.msra.mxu0 0
  %90 = vmatprep.subr.bf16.mxu0 %v33
  %91 = vmatpush1.bf16.xpose.msra.mxu0 %v32
  %92 = vmatprep.subr.bf16.mxu0 0
  %93 = vmatpush2.bf16.xpose.msra.mxu0 0
  %94 = vmatprep.subr.bf16.mxu0 0
  %95 = vmatpush2.bf16.xpose.msra.mxu0 0
  %96 = vmatprep.subr.bf16.mxu0 0
  %97 = vmatpush2.bf16.xpose.msra.mxu0 0
  %98 = vmatprep.subr.bf16.mxu0 0
  %99 = vmatpush2.bf16.xpose.msra.mxu0 0
  %100 = vmatprep.subr.bf16.mxu0 0
  %101 = vmatpush2.bf16.xpose.msra.mxu0 0
  %102 = vmatprep.subr.bf16.mxu0 0
  %103 = vmatpush2.bf16.xpose.msra.mxu0 0
  %104 = vmatprep.subr.bf16.mxu0 0
  %105 = vmatpush2.bf16.xpose.msra.mxu0 0
  %106 = vmatprep.subr.bf16.mxu0 0
  %107 = vmatpush2.bf16.xpose.msra.mxu0 0
  %108 = vmatprep.mubr.bf16.mxu0 %v33
  %109 = vmatmul.mubr.bf16.gmra.mxu0 %v32
  %v110 = vpop.f32.mrf.mxu0
  %v111 = vadd.f32 0.0, %v110
  %v112 = vpop.f32.mrf.mxu0
  %v113 = vpop.f32.mrf.mxu0
  %v114 = vpop.f32.mrf.mxu0
  %115 = vdwg.mxu0
  %v116 = vadd.f32 %v34, %v71
  %v117 = vadd.f32 %v35, %v111
  %vm118 = vcmask 27648
  %119 = vst.msk [vmem:[#allocation2] sm:$0xf] %vm118, %v116
  %120 = vst.msk [vmem:[#allocation2 + $0x4] sm:$0xf] %vm118, %v117
  %v121 = vld [vmem:[#allocation3] sm:$0xf]
  %v122 = vld [vmem:[#allocation3 + $0x4] sm:$0xf]
  %vm123 = vcmask 1043456
  %v124 = vsel %vm123, %v22, 0.0
  %v125 = vsel %vm123, %v26, 0.0
  %v126 = vadd.f32 %v124, %v125
  %127 = vadd.xlane.f32.xlu0 %v126
  %v128 = vpop.xlane.xlu0 %127
  %v129 = vsel %vm123, %v23, 0.0
  %v130 = vsel %vm123, %v27, 0.0
  %v131 = vadd.f32 %v129, %v130
  %132 = vadd.xlane.f32.xlu0 %v131
  %v133 = vpop.xlane.xlu0 %132
  %v134 = vadd.f32 %v121, %v128
  %v135 = vadd.f32 %v122, %v133
  %vm136 = vcmask 3072
  %137 = vst.msk [vmem:[#allocation3] sm:$0xf] %vm136, %v134
  %138 = vst.msk [vmem:[#allocation3 + $0x4] sm:$0xf] %vm136, %v135
  // Predicated region
  $region14: #{planar_attention.2} parent=0 // pred_check
    %p139 = pneg %p12
  $region15: #{planar_attention.2} parent=0 // pred_check_branch
    %141 = sbr.rel (%p139) target = $region17
  $region16: #{planar_attention.2} parent=0 // pred_region
    %v142 = vld [vmem:[#allocation2] sm:$0xf]
    %v143 = vld [vmem:[#allocation2 + $0x4] sm:$0xf]
    %v144 = vld [vmem:[%s1] sm:$0xf]
    %v145 = vlaneseq
    %v146 = vshrl.u32 %v145, 7
    %v147 = vlaneseq
    %v148 = vand.u32 %v147, 127
    %vm149 = vcmp.eq.s32.totalorder %v146, %v148
    %v150 = vsel %vm149, %v142, 0.0
    %v151 = vsel %vm149, %v143, 0.0
    %v152 = vmul.f32 %v142, %v144
    %v153 = vmul.f32 %v143, %v144
    %v154 = vsel %vm118, %v152, 0.0
    %155 = vadd.xlane.f32.xlu0 %v154
    %v156 = vpop.xlane.xlu0 %155
    %v157 = vsel %vm118, %v153, 0.0
    %158 = vadd.xlane.f32.xlu0 %v157
    %v159 = vpop.xlane.xlu0 %158
    %v160 = vsel %vm118, %v150, 0.0
    %161 = vadd.xlane.f32.xlu0 %v160
    %v162 = vpop.xlane.xlu0 %161
    %v163 = vsel %vm118, %v151, 0.0
    %164 = vadd.xlane.f32.xlu0 %v163
    %v165 = vpop.xlane.xlu0 %164
    %v166 = vsel %vm118, %v142, 0.0
    %167 = vadd.xlane.f32.xlu0 %v166
    %v168 = vpop.xlane.xlu0 %167
    %v169 = vsel %vm118, %v143, 0.0
    %170 = vadd.xlane.f32.xlu0 %v169
    %v171 = vpop.xlane.xlu0 %170
    %v172 = vmul.f32 %v142, %v142
    %v173 = vmul.f32 %v143, %v143
    %v174 = vsel %vm118, %v172, 0.0
    %175 = vadd.xlane.f32.xlu0 %v174
    %v176 = vpop.xlane.xlu0 %175
    %v177 = vsel %vm118, %v173, 0.0
    %178 = vadd.xlane.f32.xlu0 %v177
    %v179 = vpop.xlane.xlu0 %178
    %vm180 = vcmp.eq.s32.totalorder %v148, 0
    %v181 = vsel %vm180, %v156, 0.0
    %v182 = vsel %vm180, %v159, 0.0
    %vm183 = vcmp.eq.s32.totalorder %v148, 1
    %v184 = vld [vmem:[#allocation3] sm:$0xf]
    %v185 = vld [vmem:[#allocation3 + $0x4] sm:$0xf]
    %187 = vset.pattern.permute.xlu0 0
    %188 = vperm.xlu0 %187, %v184
    %v189 = vpop.permute.xlu0 %188
    %192 = vset.pattern.permute.xlu0 0
    %193 = vperm.xlu0 %192, %v185
    %v194 = vpop.permute.xlu0 %193
    %v196 = vsel %vm183, %v189, 0.0
    %v197 = vsel %vm183, %v194, 0.0
    %v198 = vadd.f32 %v181, %v196
    %v199 = vadd.f32 %v182, %v197
    %vm200 = vcmp.eq.s32.totalorder %v148, 2
    %v201 = vsel %vm200, %v162, 0.0
    %v202 = vsel %vm200, %v165, 0.0
    %v203 = vadd.f32 %v198, %v201
    %v204 = vadd.f32 %v199, %v202
    %vm205 = vcmp.eq.s32.totalorder %v148, 3
    %v206 = vsel %vm205, %v168, 0.0
    %v207 = vsel %vm205, %v171, 0.0
    %v208 = vadd.f32 %v203, %v206
    %v209 = vadd.f32 %v204, %v207
    %vm210 = vcmp.eq.s32.totalorder %v148, 4
    %v211 = vsel %vm210, %v176, 0.0
    %v212 = vsel %vm210, %v179, 0.0
    %v213 = vadd.f32 %v208, %v211
    %v214 = vadd.f32 %v209, %v212
    %vm215 = vcmask 60416
    %216 = vst.msk [vmem:[%s2] sm:$0xf] %vm215, %v213
    %217 = vst.msk [vmem:[%s2 + $0x4] sm:$0xf] %vm215, %v214
  $region17: #{planar_attention.2} parent=0 // pred_fallthru
    _
  // Predicated region
  $region18: #{planar_attention.2} parent=0 // pred_check
    _
  $region19: #{planar_attention.2} parent=0 // pred_check_branch
    %219 = sbr.rel (0) target = $region21
  $region20: #{planar_attention.2} parent=0 // pred_region
    _
  $region21: #{planar_attention.2} parent=0 // pred_fallthru
    _
  // Predicated region
  $region22: #{planar_attention.2} parent=0 // pred_check
    _
  $region23: #{planar_attention.2} parent=0 // pred_check_branch
    %221 = sbr.rel (0) target = $region25
  $region24: #{planar_attention.2} parent=0 // pred_region
    _
  $region25: #{planar_attention.2} parent=0 // pred_fallthru
    _

</llo_original>
